<compile_context>
chip_gen: v6e
topology: v6e:2x2x1
jax: 0.10.0
libtpu: 0.0.40
codegen_flags: <defaults>
</compile_context>

<pallas_src>
import numpy as np
import jax
import jax.numpy as jnp
from jax.experimental import pallas as pl
from jax.experimental.pallas import tpu as pltpu


MAX_LEN = 8                                   # max codes per source
B_TILE = 8                                    # patients per grid step (sublane multiple)
NSLOTS = ((4 * MAX_LEN + 1 + 7) // 8) * 8     # 4*MAX_LEN code slots + 1 bias slot -> 40
VOCAB_PAD = 32                                # per-source row block in W_fold
K_DIM = 4 * VOCAB_PAD                         # 128 == MXU contraction dim, lane-dense
V_PAD = 128                                   # lane-dense output width (> vocab_size[3])


# ----------------------------------------------------------------------------
# Kernel
# ----------------------------------------------------------------------------
def _fused_kernel(idx_ref, const_ref, out_ref):
    """idx_ref:   (B_TILE, NSLOTS, 1) int32 - globally-offset, sentinel-padded code ids
       const_ref: (K_DIM + V_PAD, V_PAD) f32 - [W_fold (incl. bias row) ; 0.0005*adj]
       out_ref:   (B_TILE, V_PAD) f32 - result in lanes [:V], neg scalar in lane V_PAD-1
    """
    bt, s, _ = idx_ref.shape
    kw, vp = const_ref.shape
    k = kw - vp

    # Vectorized histogram: one lane-iota compare + one sublane reduce.
    iota = jax.lax.broadcasted_iota(jnp.int32, (bt, s, k), 2)
    hits = (iota == idx_ref[...]).astype(jnp.float32)              # (bt, s, k)
    counts = jnp.sum(hits, axis=1)                                  # (bt, k)

    w_fold = const_ref[0:k, :]                                      # (k, vp)
    adj_s = const_ref[k:kw, :]                                      # (vp, vp)

    # Embedding-sum + fuse + concat + Linear(+bias) == one MXU matmul.
    res = jnp.dot(counts, w_fold, preferred_element_type=jnp.float32)   # (bt, vp)
    p = jax.nn.sigmoid(res)                                              # EUP
    # DDI term via the MXU: sum_ij p_i p_j (0.0005*A_ij) = sum_j p_j (p @ A_s)_j
    q = jnp.dot(p, adj_s, preferred_element_type=jnp.float32)            # (bt, vp)
    neg = jnp.sum(p * q, axis=-1, keepdims=True)                         # (bt, 1)

    lane = jax.lax.broadcasted_iota(jnp.int32, (bt, vp), 1)
    out_ref[...] = jnp.where(lane == (vp - 1), neg, res)


def fused_forward(idx, const):
    """Batched pallas_call: grid over batch tiles, constants VMEM-resident."""
    b = idx.shape[0]
    assert b % B_TILE == 0
    return pl.pallas_call(
        _fused_kernel,
        out_shape=jax.ShapeDtypeStruct((b, V_PAD), jnp.float32),
        grid=(b // B_TILE,),
        in_specs=[
            pl.BlockSpec((B_TILE, NSLOTS, 1), lambda i: (i, 0, 0)),      # per-tile indices
            pl.BlockSpec((K_DIM + V_PAD, V_PAD), lambda i: (0, 0)),      # constants (loaded once)
        ],
        out_specs=pl.BlockSpec((B_TILE, V_PAD), lambda i: (i, 0)),
        compiler_params=pltpu.CompilerParams(
            dimension_semantics=("parallel",)),                          # 2 TCs on v7x
    )(idx, const)


# ----------------------------------------------------------------------------
# Parameter construction (mirrors the module's __init__ shapes / init ranges).
# ----------------------------------------------------------------------------
def make_params(key, vocab_size, emb_dim):
    keys = jax.random.split(key, 8)
    initrange = 0.1
    embeddings = [
        jax.random.uniform(keys[i], (vocab_size[i], emb_dim),
                           minval=-initrange, maxval=initrange, dtype=jnp.float32)
        for i in range(4)
    ]
    emb_fuse_weight = jax.random.normal(keys[4], (4, 1), dtype=jnp.float32)
    fan_in = 4 * emb_dim
    bound = 1.0 / float(np.sqrt(fan_in))
    q_w = jax.random.uniform(keys[5], (fan_in, vocab_size[3]),
                             minval=-bound, maxval=bound, dtype=jnp.float32)
    q_b = jax.random.uniform(keys[6], (1, vocab_size[3]),
                             minval=-bound, maxval=bound, dtype=jnp.float32)
    return embeddings, emb_fuse_weight, q_w, q_b


def prepare_kernel_const(params, ddi_adj, vocab_size):
    """Offline folding: per-source W_fold[k] = table_k @ (w_k * W_k), bias in a
    reserved zero row, V padded to 128 lanes, adjacency pre-scaled by 0.0005,
    everything coalesced into one constant buffer."""
    embeddings, emb_fuse_weight, q_w, q_b = params
    emb_dim = embeddings[0].shape[1]
    V = vocab_size[3]
    assert max(vocab_size) <= VOCAB_PAD - 1   # guarantees zero sentinel + bias rows
    assert V < V_PAD                          # neg scalar lives in the last lane

    blocks = []
    for k in range(4):
        tbl = jnp.zeros((VOCAB_PAD, emb_dim), jnp.float32).at[:vocab_size[k]].set(embeddings[k])
        wk = emb_fuse_weight[k, 0]
        Wk = q_w[k * emb_dim:(k + 1) * emb_dim, :]                    # (emb_dim, V)
        blocks.append(tbl @ (wk * Wk))                                # (VOCAB_PAD, V)
    w_fold = jnp.concatenate(blocks, axis=0)                          # (K_DIM, V)
    # Linear bias goes into the reserved (otherwise zero) last row; every
    # patient gets exactly one index pointing at it (see pack_patients).
    w_fold = w_fold.at[K_DIM - 1, :].set(q_b[0])

    w_fold_p = jnp.zeros((K_DIM, V_PAD), jnp.float32).at[:, :V].set(w_fold)
    adj_p = jnp.zeros((V_PAD, V_PAD), jnp.float32).at[:V, :V].set(0.0005 * ddi_adj)
    return jnp.concatenate([w_fold_p, adj_p], axis=0)                 # (K_DIM + V_PAD, V_PAD)


def pack_patients(patients, vocab_size):
    """Host-side packing: per-source code lists -> flat GLOBAL row indices
    (source k, code c -> k*VOCAB_PAD + c).  Unused slots point at a guaranteed
    all-zero padding row (no length masking needed); one slot points at the
    reserved bias row.  Batch padded to a multiple of B_TILE."""
    b = len(patients)
    b_pad = ((b + B_TILE - 1) // B_TILE) * B_TILE
    zero_row = vocab_size[0]                  # padding row of block 0 (zero in W_fold)
    bias_row = K_DIM - 1
    idx = np.full((b_pad, NSLOTS), zero_row, dtype=np.int32)
    for i, patient in enumerate(patients):
        adm = patient[-1]
        seqs = [list(adm[5]), list(adm[6]), list(adm[7])]
        seqs.append([] if len(patient) == 1 else list(patient[-2][8]))
        for k, s in enumerate(seqs):
            assert len(s) <= MAX_LEN
            for j, c in enumerate(s):
                idx[i, k * MAX_LEN + j] = k * VOCAB_PAD + int(c)
        idx[i, 4 * MAX_LEN] = bias_row
    return jnp.asarray(idx[:, :, None])       # (b_pad, NSLOTS, 1)


def basic_model_forward(patients, const, vocab_size):
    """Batched forward: returns (results (B, V), batch_neg (B,))."""
    V = vocab_size[3]
    idx = pack_patients(patients, vocab_size)
    out = fused_forward(idx, const)
    b = len(patients)
    return out[:b, :V], out[:b, V_PAD - 1]


# ----------------------------------------------------------------------------
# Pure-JAX reference (unfused, unfolded) for correctness checking.
# ----------------------------------------------------------------------------
def reference_forward(patient, params, ddi_adj, emb_dim):
    embeddings, emb_fuse_weight, q_w, q_b = params
    adm = patient[-1]

    def sum_emb(table, ids):
        ids = jnp.asarray(ids, dtype=jnp.int32)
        return jnp.take(table, ids, axis=0).sum(axis=0, keepdims=True)

    i1 = sum_emb(embeddings[0], adm[5])
    i2 = sum_emb(embeddings[1], adm[6])
    i3 = sum_emb(embeddings[2], adm[7])
    if len(patient) == 1:
        i4 = jnp.zeros((1, emb_dim), dtype=jnp.float32)
    else:
        i4 = sum_emb(embeddings[3], patient[-2][8])
    w = emb_fuse_weight
    x = jnp.concatenate([i1 * w[0], i2 * w[1], i3 * w[2], i4 * w[3]], axis=-1)
    res = x @ q_w + q_b
    p = jax.nn.sigmoid(res)
    neg = 0.0005 * jnp.sum((p.T * p) * ddi_adj)
    return res[0], neg


if __name__ == "__main__":
    key = jax.random.PRNGKey(0)
    emb_dim = 32
    vocab_size = [10, 12, 14, 16]
    V = vocab_size[3]

    pkey, dkey = jax.random.split(key)
    params = make_params(pkey, vocab_size, emb_dim)

    # Deterministic symmetric 0/1 DDI adjacency with zero diagonal.
    raw = jax.random.uniform(dkey, (V, V))
    adj01 = (raw > 0.7).astype(jnp.float32)
    ddi_adj = jnp.maximum(adj01, adj01.T) * (1.0 - jnp.eye(V, dtype=jnp.float32))

    const = prepare_kernel_const(params, ddi_adj, vocab_size)

    # Hand-built patients: 2-admission (with duplicate codes) and single-admission.
    adm_prev = {8: [0, 3, 7, 11, 2, 5]}
    adm_last = {5: [1, 4, 7, 2, 9], 6: [0, 3, 3, 6], 7: [2, 5, 13]}
    patients = [[adm_prev, adm_last], [adm_last]]

    # Plus a deterministic random batch (exercises grid > 1 / both TCs on v7x).
    rng = np.random.RandomState(0)
    for _ in range(11):
        adm = {5: rng.randint(0, vocab_size[0], size=rng.randint(1, MAX_LEN + 1)).tolist(),
               6: rng.randint(0, vocab_size[1], size=rng.randint(1, MAX_LEN + 1)).tolist(),
               7: rng.randint(0, vocab_size[2], size=rng.randint(1, MAX_LEN + 1)).tolist()}
        if rng.rand() < 0.5:
            prev = {8: rng.randint(0, vocab_size[3], size=rng.randint(1, MAX_LEN + 1)).tolist()}
            patients.append([prev, adm])
        else:
            patients.append([adm])

    results, negs = basic_model_forward(patients, const, vocab_size)
    results = jax.block_until_ready(results)
    negs = jax.block_until_ready(negs)

    ok = True
    for i, patient in enumerate(patients):
        res_ref, neg_ref = reference_forward(patient, params, ddi_adj, emb_dim)
        ok &= bool(jnp.allclose(results[i], res_ref, atol=5e-5, rtol=1e-4))
        ok &= bool(jnp.allclose(negs[i], neg_ref, atol=1e-6, rtol=1e-4))

    assert ok
    print("KERNEL_OK")
</pallas_src>

<mosaic_0001>
module attributes {stable_mosaic.version = 11 : i64} {
  func.func @_fused_kernel(%arg0: i32, %arg1: memref<8x40x1xi32, #tpu.memory_space<vmem>>, %arg2: memref<256x128xf32, #tpu.memory_space<vmem>>, %arg3: memref<8x128xf32, #tpu.memory_space<vmem>>) attributes {dimension_semantics = [#tpu.dimension_semantics<parallel>], iteration_bounds = array<i64: 2>, scalar_prefetch = 0 : i64, scratch_operands = 0 : i64, tpu.core_type = #tpu.core_type<tc>, window_params = [{transform_indices = @transform_0, window_bounds = array<i64: 8, 40, 1>}, {pipeline_mode = #tpu.pipeline_mode<synchronous>, transform_indices = @transform_1, window_bounds = array<i64: 256, 128>}, {transform_indices = @transform_2, window_bounds = array<i64: 8, 128>}]} {
    %0 = tpu.iota {dimensions = array<i32: 2>} : vector<8x40x128xi32>
    %c0 = arith.constant 0 : index
    %c0_0 = arith.constant 0 : index
    %c0_1 = arith.constant 0 : index
    %1 = vector.load %arg1[%c0, %c0_0, %c0_1] : memref<8x40x1xi32, #tpu.memory_space<vmem>>, vector<8x40x1xi32>
    %2 = vector.broadcast %1 : vector<8x40x1xi32> to vector<8x40x128xi32>
    %3 = arith.cmpi eq, %0, %2 : vector<8x40x128xi32>
    %4 = arith.extui %3 : vector<8x40x128xi1> to vector<8x40x128xi32>
    %5 = arith.sitofp %4 : vector<8x40x128xi32> to vector<8x40x128xf32>
    %cst = arith.constant dense<0.000000e+00> : vector<8x128xf32>
    %6 = vector.multi_reduction <add>, %5, %cst [1] : vector<8x40x128xf32> to vector<8x128xf32>
    %c0_2 = arith.constant 0 : index
    %c0_3 = arith.constant 0 : index
    %7 = vector.load %arg2[%c0_2, %c0_3] : memref<256x128xf32, #tpu.memory_space<vmem>>, vector<128x128xf32>
    %c128 = arith.constant 128 : index
    %c0_4 = arith.constant 0 : index
    %8 = vector.load %arg2[%c128, %c0_4] : memref<256x128xf32, #tpu.memory_space<vmem>>, vector<128x128xf32>
    %cst_5 = arith.constant dense<0.000000e+00> : vector<8x128xf32>
    %9 = tpu.matmul %6, %7, %cst_5 {dimension_numbers = #tpu.dot_dimension_numbers<[1], [0], [0], [1], [0, 0, 1, 1], [], []>} : vector<8x128xf32>, vector<128x128xf32>, vector<8x128xf32> -> vector<8x128xf32>
    %10 = arith.negf %9 : vector<8x128xf32>
    %11 = math.exp %10 : vector<8x128xf32>
    %cst_6 = arith.constant 1.000000e+00 : f32
    %12 = vector.broadcast %cst_6 : f32 to vector<8x128xf32>
    %13 = arith.addf %12, %11 : vector<8x128xf32>
    %14 = arith.divf %12, %13 : vector<8x128xf32>
    %cst_7 = arith.constant dense<0.000000e+00> : vector<8x128xf32>
    %15 = tpu.matmul %14, %8, %cst_7 {dimension_numbers = #tpu.dot_dimension_numbers<[1], [0], [0], [1], [0, 0, 1, 1], [], []>} : vector<8x128xf32>, vector<128x128xf32>, vector<8x128xf32> -> vector<8x128xf32>
    %16 = arith.mulf %14, %15 : vector<8x128xf32>
    %cst_8 = arith.constant dense<0.000000e+00> : vector<8xf32>
    %17 = vector.multi_reduction <add>, %16, %cst_8 [1] : vector<8x128xf32> to vector<8xf32>
    %18 = vector.shape_cast %17 : vector<8xf32> to vector<8x1xf32>
    %19 = tpu.iota {dimensions = array<i32: 1>} : vector<8x128xi32>
    %c127_i32 = arith.constant 127 : i32
    %20 = vector.broadcast %c127_i32 : i32 to vector<8x128xi32>
    %21 = arith.cmpi eq, %19, %20 : vector<8x128xi32>
    %22 = vector.shape_cast %18 : vector<8x1xf32> to vector<8x1xf32>
    %23 = vector.broadcast %22 : vector<8x1xf32> to vector<8x128xf32>
    %24 = arith.select %21, %23, %9 : vector<8x128xi1>, vector<8x128xf32>
    %c0_9 = arith.constant 0 : index
    %c0_10 = arith.constant 0 : index
    %25 = vector.load %arg3[%c0_9, %c0_10] : memref<8x128xf32, #tpu.memory_space<vmem>>, vector<8x128xf32>
    tpu.vector_store %arg3[%c0_9, %c0_10], %24 {strides = array<i32>} : memref<8x128xf32, #tpu.memory_space<vmem>>, vector<8x128xf32>,
    return
  }
  func.func @transform_0(%arg0: i32) -> (i32, i32, i32) {
    %c0_i32 = arith.constant 0 : i32
    %c0_i32_0 = arith.constant 0 : i32
    %c0_i32_1 = arith.constant 0 : i32
    return %arg0, %c0_i32, %c0_i32_0 : i32, i32, i32
  }
  func.func @transform_1(%arg0: i32) -> (i32, i32) {
    %c0_i32 = arith.constant 0 : i32
    %c0_i32_0 = arith.constant 0 : i32
    %c0_i32_1 = arith.constant 0 : i32
    return %c0_i32, %c0_i32_0 : i32, i32
  }
  func.func @transform_2(%arg0: i32) -> (i32, i32) {
    %c0_i32 = arith.constant 0 : i32
    %c0_i32_0 = arith.constant 0 : i32
    return %arg0, %c0_i32 : i32, i32
  }
}

</mosaic_0001>

<llo_original>
// kernel: tpu_custom_call.1
$region0: #{tpu_custom_call.1}
  #allocation0 [shape = 'u32[]', space=smem, size = 0x4, offset = 0x4, fixed_abs, tag = 'smem constant byte address 0x4 - core index']
  #allocation1 [shape = 'u32[144,128]{1,0:T(1,128)}', space=vmem, size = 0x12000, scoped, tag = 'internal scratch']
  %s0 = inlined_call_operand.vmem [shape: s32[16,40,1], index: 0, kind: input, shape index: {}]
  %s1 = inlined_call_operand.vmem [shape: f32[256,128], index: 1, kind: input, shape index: {}]
  %s2 = inlined_call_operand.hbm [shape: f32[16,128], index: 2, kind: output, shape index: {}]
  %s3 = sld [smem:[#allocation0]]
  $region41: #{tpu_custom_call.1} parent=0
    _
  %s5 = ssub.s32 1, %s3
  %s6 = scalar_select 0, %s5, %s3
  $region1: #{tpu_custom_call.1} parent=0
    #allocation2 [shape = 'u8[8192]{0}', space=vmem, size = 0x2000, scoped, tag = 'output window, operand 0']
    #allocation3 [shape = 's32[2]{0}', space=sflag, size = 0x8, scoped, tag = 'scoped memory for tpu_custom_call.1']
    %7 = vsyncpa [#allocation3], 0
    %s8 = scalar_lea.sflag [#allocation3], 1
    %9 = vsyncpa %s8, 0
    loop: start=0, step=1, limit=4
    $region2: #{tpu_custom_call.1} parent=1 // loop_pre_header
      _
    $region3: #{tpu_custom_call.1} parent=1 // loop_header
      %s11 = sphi 0, %s15
      %p12 = scmp.ge.s32.totalorder %s11, 4
      %s21 = sphi 0, %s23
      %s24 = sphi 0, %s21
      %s25 = sphi 0, %s24
      %s41 = sphi 0, %s25
      %s45 = sphi 0, %s45
      %s47 = sphi 0, %s45
      %s48 = sphi 0, %s47
      %s62 = sphi 0, %s48
      %s68 = sphi 0, %s70
      %s71 = sphi 0, %s68
      %s72 = sphi 0, %s71
      %s88 = sphi 0, %s72
    $region4: #{tpu_custom_call.1} parent=1 // loop_header_branch
      %14 = sbr.rel (%p12) target = $region8
    $region5: #{tpu_custom_call.1} parent=1 // loop_body
      %s16 = ssub.s32 %s11, 1
      %s17 = ssub.s32 %s11, 2
      %s18 = sadd.s32 %s11, 1
      %s19 = ssub.s32 %s11, %s18
      %p20 = scmp.eq.s32.totalorder %s19, 0
      %s22 = sadd.s32 %s21, 1
      %s23 = scalar_select %p20, %s21, %s22
      %p26 = pneg %p20
      %p27 = scmp.eq.s32.totalorder %s11, 1
      %p28 = por %p26, %p27
      %p29 = scmp.ne.s32.totalorder %s21, %s24
      %p30 = scmp.eq.s32.totalorder %s11, 0
      %p31 = por %p29, %p30
      %p32 = scmp.ne.s32.totalorder %s21, %s24
      %p33 = scmp.eq.s32.totalorder %s16, 1
      %p34 = por %p32, %p33
      %p35 = scmp.ne.s32.totalorder %s24, %s25
      %p36 = scmp.eq.s32.totalorder %s16, 0
      %p37 = por %p35, %p36
      %p38 = scmp.ne.s32.totalorder %s24, %s25
      %p39 = scmp.eq.s32.totalorder %s17, 1
      %p40 = por %p38, %p39
      %p42 = scmp.ne.s32.totalorder %s25, %s41
      %p43 = scmp.eq.s32.totalorder %s17, 0
      %p44 = por %p42, %p43
      %s46 = sadd.s32 %s45, 1
      %p49 = scmp.eq.s32.totalorder %s11, 1
      %p50 = scmp.ne.s32.totalorder %s45, %s47
      %p51 = scmp.eq.s32.totalorder %s11, 0
      %p52 = por %p50, %p51
      %p53 = scmp.ne.s32.totalorder %s45, %s47
      %p54 = scmp.eq.s32.totalorder %s16, 1
      %p55 = por %p53, %p54
      %p56 = scmp.ne.s32.totalorder %s47, %s48
      %p57 = scmp.eq.s32.totalorder %s16, 0
      %p58 = por %p56, %p57
      %p59 = scmp.ne.s32.totalorder %s47, %s48
      %p60 = scmp.eq.s32.totalorder %s17, 1
      %p61 = por %p59, %p60
      %p63 = scmp.ne.s32.totalorder %s48, %s62
      %p64 = scmp.eq.s32.totalorder %s17, 0
      %p65 = por %p63, %p64
      %s66 = ssub.s32 %s11, %s18
      %p67 = scmp.eq.s32.totalorder %s66, 0
      %s69 = sadd.s32 %s68, 1
      %s70 = scalar_select %p67, %s68, %s69
      %p73 = pneg %p67
      %p74 = scmp.eq.s32.totalorder %s11, 1
      %p75 = por %p73, %p74
      %p76 = scmp.ne.s32.totalorder %s68, %s71
      %p77 = scmp.eq.s32.totalorder %s11, 0
      %p78 = por %p76, %p77
      %p79 = scmp.ne.s32.totalorder %s68, %s71
      %p80 = scmp.eq.s32.totalorder %s16, 1
      %p81 = por %p79, %p80
      %p82 = scmp.ne.s32.totalorder %s71, %s72
      %p83 = scmp.eq.s32.totalorder %s16, 0
      %p84 = por %p82, %p83
      %p85 = scmp.ne.s32.totalorder %s71, %s72
      %p86 = scmp.eq.s32.totalorder %s17, 1
      %p87 = por %p85, %p86
      %p89 = scmp.ne.s32.totalorder %s72, %s88
      %p90 = scmp.eq.s32.totalorder %s17, 0
      %p91 = por %p89, %p90
      %p92 = scmp.le.s32.totalorder 1, %s11
      %p93 = scmp.lt.s32.totalorder %s11, 3
      %p94 = pnand %p92, %p93
      %p95 = pneg %p94
      // Predicated region
      $region9: #{tpu_custom_call.1} parent=5 // pred_check
        _
      $region10: #{tpu_custom_call.1} parent=5 // pred_check_branch
        %97 = sbr.rel (%p94) target = $region12
      $region11: #{tpu_custom_call.1} parent=5 // pred_region
        %s98 = ssub.s32 %s11, 1
        // Predicated region
        $region13: #{tpu_custom_call.1} parent=11 // pred_check
          %p99 = pneg %p58
        $region14: #{tpu_custom_call.1} parent=11 // pred_check_branch
          %101 = sbr.rel (%p99) target = $region16
        $region15: #{tpu_custom_call.1} parent=11 // pred_region
          _
        $region16: #{tpu_custom_call.1} parent=11 // pred_fallthru
          _
      $region12: #{tpu_custom_call.1} parent=5 // pred_fallthru
        _
      %p102 = scmp.lt.s32.totalorder %s11, 2
      // Predicated region
      $region17: #{tpu_custom_call.1} parent=5 // pred_check
        %p103 = pneg %p102
      $region18: #{tpu_custom_call.1} parent=5 // pred_check_branch
        %105 = sbr.rel (%p103) target = $region20
      $region19: #{tpu_custom_call.1} parent=5 // pred_region
        // Predicated region
        $region21: #{tpu_custom_call.1} parent=19 // pred_check
          %p106 = pneg %p31
        $region22: #{tpu_custom_call.1} parent=19 // pred_check_branch
          %108 = sbr.rel (%p106) target = $region24
        $region23: #{tpu_custom_call.1} parent=19 // pred_region
          %s109 = smul.u32 8, %s11
          %p110 = scmp.lt.s32.totalorder %s109, 15
          %s111 = scalar_select %p110, %s109, 15
          %s112 = smul.addr %s111, 5
          %s113 = smul.addr %s112, 8
          %s114 = scalar_lea.vmem %s0, %s113
          %s115 = smul.u32 8, %s11
        $region24: #{tpu_custom_call.1} parent=19 // pred_fallthru
          _
      $region20: #{tpu_custom_call.1} parent=5 // pred_fallthru
        _
      %p116 = scmp.le.s32.totalorder 1, %s11
      %p117 = scmp.lt.s32.totalorder %s11, 3
      %p118 = pnand %p116, %p117
      %p119 = pneg %p118
      // Predicated region
      $region25: #{tpu_custom_call.1} parent=5 // pred_check
        _
      $region26: #{tpu_custom_call.1} parent=5 // pred_check_branch
        %121 = sbr.rel (%p118) target = $region28
      $region27: #{tpu_custom_call.1} parent=5 // pred_region
        %s122 = ssub.s32 %s11, 1
        %s123 = smul.u32 8, %s16
        %p124 = scmp.lt.s32.totalorder %s123, 15
        %s125 = scalar_select %p124, %s123, 15
        %s126 = smul.addr %s125, 5
        %s127 = smul.addr %s126, 8
        %s128 = scalar_lea.vmem %s0, %s127
        %p129 = pneg %p37
        %p130 = pneg %p34
        %p131 = pneg %p58
        %p132 = pneg %p55
        %p133 = pneg %p84
        %p134 = pneg %p81
        %s135 = sand.u32 %s71, 1
        %s136 = scalar_lea.sflag [#allocation3], %s135
        %s137 = sand.u32 %s71, 1
        %s138 = smul.addr %s137, 8
        %s139 = scalar_lea.vmem [#allocation2], %s138
        %s140 = smul.u32 8, %s16
        %p141 = scmp.lt.s32.totalorder %s140, 15
        %s142 = scalar_select %p141, %s140, 15
        %s143 = smul.addr %s142, 5
        %s144 = smul.addr %s143, 8
        %s145 = scalar_lea.vmem %s0, %s144
        %s146 = smul.u32 8, %s16
        %v147 = vlaneseq
        %v148 = vand.u32 %v147, 127
        %v149 = vld [vmem:[%s145] sm:$0xff]
        %v150 = vld [vmem:[%s145 + $0x8] sm:$0xff]
        %v151 = vld [vmem:[%s145 + $0x10] sm:$0xff]
        %v152 = vld [vmem:[%s145 + $0x18] sm:$0xff]
        %v153 = vld [vmem:[%s145 + $0x20] sm:$0xff]
        %v154 = vld [vmem:[%s145 + $0x28] sm:$0xff]
        %v155 = vld [vmem:[%s145 + $0x30] sm:$0xff]
        %v156 = vld [vmem:[%s145 + $0x38] sm:$0xff]
        %v157 = vld [vmem:[%s145 + $0x40] sm:$0xff]
        %v158 = vld [vmem:[%s145 + $0x48] sm:$0xff]
        %v159 = vld [vmem:[%s145 + $0x50] sm:$0xff]
        %v160 = vld [vmem:[%s145 + $0x58] sm:$0xff]
        %v161 = vld [vmem:[%s145 + $0x60] sm:$0xff]
        %v162 = vld [vmem:[%s145 + $0x68] sm:$0xff]
        %v163 = vld [vmem:[%s145 + $0x70] sm:$0xff]
        %v164 = vld [vmem:[%s145 + $0x78] sm:$0xff]
        %v165 = vld [vmem:[%s145 + $0x80] sm:$0xff]
        %v166 = vld [vmem:[%s145 + $0x88] sm:$0xff]
        %v167 = vld [vmem:[%s145 + $0x90] sm:$0xff]
        %v168 = vld [vmem:[%s145 + $0x98] sm:$0xff]
        %v169 = vld [vmem:[%s145 + $0xa0] sm:$0xff]
        %v170 = vld [vmem:[%s145 + $0xa8] sm:$0xff]
        %v171 = vld [vmem:[%s145 + $0xb0] sm:$0xff]
        %v172 = vld [vmem:[%s145 + $0xb8] sm:$0xff]
        %v173 = vld [vmem:[%s145 + $0xc0] sm:$0xff]
        %v174 = vld [vmem:[%s145 + $0xc8] sm:$0xff]
        %v175 = vld [vmem:[%s145 + $0xd0] sm:$0xff]
        %v176 = vld [vmem:[%s145 + $0xd8] sm:$0xff]
        %v177 = vld [vmem:[%s145 + $0xe0] sm:$0xff]
        %v178 = vld [vmem:[%s145 + $0xe8] sm:$0xff]
        %v179 = vld [vmem:[%s145 + $0xf0] sm:$0xff]
        %v180 = vld [vmem:[%s145 + $0xf8] sm:$0xff]
        %v181 = vld [vmem:[%s145 + $0x100] sm:$0xff]
        %v182 = vld [vmem:[%s145 + $0x108] sm:$0xff]
        %v183 = vld [vmem:[%s145 + $0x110] sm:$0xff]
        %v184 = vld [vmem:[%s145 + $0x118] sm:$0xff]
        %v185 = vld [vmem:[%s145 + $0x120] sm:$0xff]
        %v186 = vld [vmem:[%s145 + $0x128] sm:$0xff]
        %v187 = vld [vmem:[%s145 + $0x130] sm:$0xff]
        %v188 = vld [vmem:[%s145 + $0x138] sm:$0xff]
        %189 = vset.pattern.permute.xlu0 0
        %190 = vperm.xlu0 %189, %v149
        %v191 = vpop.permute.xlu0 %190
        %192 = vset.pattern.permute.xlu0 0
        %193 = vperm.xlu0 %192, %v150
        %v194 = vpop.permute.xlu0 %193
        %195 = vset.pattern.permute.xlu0 0
        %196 = vperm.xlu0 %195, %v151
        %v197 = vpop.permute.xlu0 %196
        %198 = vset.pattern.permute.xlu0 0
        %199 = vperm.xlu0 %198, %v152
        %v200 = vpop.permute.xlu0 %199
        %201 = vset.pattern.permute.xlu0 0
        %202 = vperm.xlu0 %201, %v153
        %v203 = vpop.permute.xlu0 %202
        %204 = vset.pattern.permute.xlu0 0
        %205 = vperm.xlu0 %204, %v154
        %v206 = vpop.permute.xlu0 %205
        %207 = vset.pattern.permute.xlu0 0
        %208 = vperm.xlu0 %207, %v155
        %v209 = vpop.permute.xlu0 %208
        %210 = vset.pattern.permute.xlu0 0
        %211 = vperm.xlu0 %210, %v156
        %v212 = vpop.permute.xlu0 %211
        %213 = vset.pattern.permute.xlu0 0
        %214 = vperm.xlu0 %213, %v157
        %v215 = vpop.permute.xlu0 %214
        %216 = vset.pattern.permute.xlu0 0
        %217 = vperm.xlu0 %216, %v158
        %v218 = vpop.permute.xlu0 %217
        %219 = vset.pattern.permute.xlu0 0
        %220 = vperm.xlu0 %219, %v159
        %v221 = vpop.permute.xlu0 %220
        %222 = vset.pattern.permute.xlu0 0
        %223 = vperm.xlu0 %222, %v160
        %v224 = vpop.permute.xlu0 %223
        %225 = vset.pattern.permute.xlu0 0
        %226 = vperm.xlu0 %225, %v161
        %v227 = vpop.permute.xlu0 %226
        %228 = vset.pattern.permute.xlu0 0
        %229 = vperm.xlu0 %228, %v162
        %v230 = vpop.permute.xlu0 %229
        %231 = vset.pattern.permute.xlu0 0
        %232 = vperm.xlu0 %231, %v163
        %v233 = vpop.permute.xlu0 %232
        %234 = vset.pattern.permute.xlu0 0
        %235 = vperm.xlu0 %234, %v164
        %v236 = vpop.permute.xlu0 %235
        %237 = vset.pattern.permute.xlu0 0
        %238 = vperm.xlu0 %237, %v165
        %v239 = vpop.permute.xlu0 %238
        %240 = vset.pattern.permute.xlu0 0
        %241 = vperm.xlu0 %240, %v166
        %v242 = vpop.permute.xlu0 %241
        %243 = vset.pattern.permute.xlu0 0
        %244 = vperm.xlu0 %243, %v167
        %v245 = vpop.permute.xlu0 %244
        %246 = vset.pattern.permute.xlu0 0
        %247 = vperm.xlu0 %246, %v168
        %v248 = vpop.permute.xlu0 %247
        %249 = vset.pattern.permute.xlu0 0
        %250 = vperm.xlu0 %249, %v169
        %v251 = vpop.permute.xlu0 %250
        %252 = vset.pattern.permute.xlu0 0
        %253 = vperm.xlu0 %252, %v170
        %v254 = vpop.permute.xlu0 %253
        %255 = vset.pattern.permute.xlu0 0
        %256 = vperm.xlu0 %255, %v171
        %v257 = vpop.permute.xlu0 %256
        %258 = vset.pattern.permute.xlu0 0
        %259 = vperm.xlu0 %258, %v172
        %v260 = vpop.permute.xlu0 %259
        %261 = vset.pattern.permute.xlu0 0
        %262 = vperm.xlu0 %261, %v173
        %v263 = vpop.permute.xlu0 %262
        %264 = vset.pattern.permute.xlu0 0
        %265 = vperm.xlu0 %264, %v174
        %v266 = vpop.permute.xlu0 %265
        %267 = vset.pattern.permute.xlu0 0
        %268 = vperm.xlu0 %267, %v175
        %v269 = vpop.permute.xlu0 %268
        %270 = vset.pattern.permute.xlu0 0
        %271 = vperm.xlu0 %270, %v176
        %v272 = vpop.permute.xlu0 %271
        %273 = vset.pattern.permute.xlu0 0
        %274 = vperm.xlu0 %273, %v177
        %v275 = vpop.permute.xlu0 %274
        %276 = vset.pattern.permute.xlu0 0
        %277 = vperm.xlu0 %276, %v178
        %v278 = vpop.permute.xlu0 %277
        %279 = vset.pattern.permute.xlu0 0
        %280 = vperm.xlu0 %279, %v179
        %v281 = vpop.permute.xlu0 %280
        %282 = vset.pattern.permute.xlu0 0
        %283 = vperm.xlu0 %282, %v180
        %v284 = vpop.permute.xlu0 %283
        %285 = vset.pattern.permute.xlu0 0
        %286 = vperm.xlu0 %285, %v181
        %v287 = vpop.permute.xlu0 %286
        %288 = vset.pattern.permute.xlu0 0
        %289 = vperm.xlu0 %288, %v182
        %v290 = vpop.permute.xlu0 %289
        %291 = vset.pattern.permute.xlu0 0
        %292 = vperm.xlu0 %291, %v183
        %v293 = vpop.permute.xlu0 %292
        %294 = vset.pattern.permute.xlu0 0
        %295 = vperm.xlu0 %294, %v184
        %v296 = vpop.permute.xlu0 %295
        %297 = vset.pattern.permute.xlu0 0
        %298 = vperm.xlu0 %297, %v185
        %v299 = vpop.permute.xlu0 %298
        %300 = vset.pattern.permute.xlu0 0
        %301 = vperm.xlu0 %300, %v186
        %v302 = vpop.permute.xlu0 %301
        %303 = vset.pattern.permute.xlu0 0
        %304 = vperm.xlu0 %303, %v187
        %v305 = vpop.permute.xlu0 %304
        %306 = vset.pattern.permute.xlu0 0
        %307 = vperm.xlu0 %306, %v188
        %v308 = vpop.permute.xlu0 %307
        %vm309 = vcmp.eq.s32.totalorder %v148, %v191
        %vm310 = vcmp.eq.s32.totalorder %v148, %v194
        %vm311 = vcmp.eq.s32.totalorder %v148, %v197
        %vm312 = vcmp.eq.s32.totalorder %v148, %v200
        %vm313 = vcmp.eq.s32.totalorder %v148, %v203
        %vm314 = vcmp.eq.s32.totalorder %v148, %v206
        %vm315 = vcmp.eq.s32.totalorder %v148, %v209
        %vm316 = vcmp.eq.s32.totalorder %v148, %v212
        %vm317 = vcmp.eq.s32.totalorder %v148, %v215
        %vm318 = vcmp.eq.s32.totalorder %v148, %v218
        %vm319 = vcmp.eq.s32.totalorder %v148, %v221
        %vm320 = vcmp.eq.s32.totalorder %v148, %v224
        %vm321 = vcmp.eq.s32.totalorder %v148, %v227
        %vm322 = vcmp.eq.s32.totalorder %v148, %v230
        %vm323 = vcmp.eq.s32.totalorder %v148, %v233
        %vm324 = vcmp.eq.s32.totalorder %v148, %v236
        %vm325 = vcmp.eq.s32.totalorder %v148, %v239
        %vm326 = vcmp.eq.s32.totalorder %v148, %v242
        %vm327 = vcmp.eq.s32.totalorder %v148, %v245
        %vm328 = vcmp.eq.s32.totalorder %v148, %v248
        %vm329 = vcmp.eq.s32.totalorder %v148, %v251
        %vm330 = vcmp.eq.s32.totalorder %v148, %v254
        %vm331 = vcmp.eq.s32.totalorder %v148, %v257
        %vm332 = vcmp.eq.s32.totalorder %v148, %v260
        %vm333 = vcmp.eq.s32.totalorder %v148, %v263
        %vm334 = vcmp.eq.s32.totalorder %v148, %v266
        %vm335 = vcmp.eq.s32.totalorder %v148, %v269
        %vm336 = vcmp.eq.s32.totalorder %v148, %v272
        %vm337 = vcmp.eq.s32.totalorder %v148, %v275
        %vm338 = vcmp.eq.s32.totalorder %v148, %v278
        %vm339 = vcmp.eq.s32.totalorder %v148, %v281
        %vm340 = vcmp.eq.s32.totalorder %v148, %v284
        %vm341 = vcmp.eq.s32.totalorder %v148, %v287
        %vm342 = vcmp.eq.s32.totalorder %v148, %v290
        %vm343 = vcmp.eq.s32.totalorder %v148, %v293
        %vm344 = vcmp.eq.s32.totalorder %v148, %v296
        %vm345 = vcmp.eq.s32.totalorder %v148, %v299
        %vm346 = vcmp.eq.s32.totalorder %v148, %v302
        %vm347 = vcmp.eq.s32.totalorder %v148, %v305
        %vm348 = vcmp.eq.s32.totalorder %v148, %v308
        %v349 = vsel %vm309, 1, 0
        %v350 = vsel %vm310, 1, 0
        %v351 = vsel %vm311, 1, 0
        %v352 = vsel %vm312, 1, 0
        %v353 = vsel %vm313, 1, 0
        %v354 = vsel %vm314, 1, 0
        %v355 = vsel %vm315, 1, 0
        %v356 = vsel %vm316, 1, 0
        %v357 = vsel %vm317, 1, 0
        %v358 = vsel %vm318, 1, 0
        %v359 = vsel %vm319, 1, 0
        %v360 = vsel %vm320, 1, 0
        %v361 = vsel %vm321, 1, 0
        %v362 = vsel %vm322, 1, 0
        %v363 = vsel %vm323, 1, 0
        %v364 = vsel %vm324, 1, 0
        %v365 = vsel %vm325, 1, 0
        %v366 = vsel %vm326, 1, 0
        %v367 = vsel %vm327, 1, 0
        %v368 = vsel %vm328, 1, 0
        %v369 = vsel %vm329, 1, 0
        %v370 = vsel %vm330, 1, 0
        %v371 = vsel %vm331, 1, 0
        %v372 = vsel %vm332, 1, 0
        %v373 = vsel %vm333, 1, 0
        %v374 = vsel %vm334, 1, 0
        %v375 = vsel %vm335, 1, 0
        %v376 = vsel %vm336, 1, 0
        %v377 = vsel %vm337, 1, 0
        %v378 = vsel %vm338, 1, 0
        %v379 = vsel %vm339, 1, 0
        %v380 = vsel %vm340, 1, 0
        %v381 = vsel %vm341, 1, 0
        %v382 = vsel %vm342, 1, 0
        %v383 = vsel %vm343, 1, 0
        %v384 = vsel %vm344, 1, 0
        %v385 = vsel %vm345, 1, 0
        %v386 = vsel %vm346, 1, 0
        %v387 = vsel %vm347, 1, 0
        %v388 = vsel %vm348, 1, 0
        %v389 = vcvt.s32.f32 %v349
        %v390 = vcvt.s32.f32 %v350
        %v391 = vcvt.s32.f32 %v351
        %v392 = vcvt.s32.f32 %v352
        %v393 = vcvt.s32.f32 %v353
        %v394 = vcvt.s32.f32 %v354
        %v395 = vcvt.s32.f32 %v355
        %v396 = vcvt.s32.f32 %v356
        %v397 = vcvt.s32.f32 %v357
        %v398 = vcvt.s32.f32 %v358
        %v399 = vcvt.s32.f32 %v359
        %v400 = vcvt.s32.f32 %v360
        %v401 = vcvt.s32.f32 %v361
        %v402 = vcvt.s32.f32 %v362
        %v403 = vcvt.s32.f32 %v363
        %v404 = vcvt.s32.f32 %v364
        %v405 = vcvt.s32.f32 %v365
        %v406 = vcvt.s32.f32 %v366
        %v407 = vcvt.s32.f32 %v367
        %v408 = vcvt.s32.f32 %v368
        %v409 = vcvt.s32.f32 %v369
        %v410 = vcvt.s32.f32 %v370
        %v411 = vcvt.s32.f32 %v371
        %v412 = vcvt.s32.f32 %v372
        %v413 = vcvt.s32.f32 %v373
        %v414 = vcvt.s32.f32 %v374
        %v415 = vcvt.s32.f32 %v375
        %v416 = vcvt.s32.f32 %v376
        %v417 = vcvt.s32.f32 %v377
        %v418 = vcvt.s32.f32 %v378
        %v419 = vcvt.s32.f32 %v379
        %v420 = vcvt.s32.f32 %v380
        %v421 = vcvt.s32.f32 %v381
        %v422 = vcvt.s32.f32 %v382
        %v423 = vcvt.s32.f32 %v383
        %v424 = vcvt.s32.f32 %v384
        %v425 = vcvt.s32.f32 %v385
        %v426 = vcvt.s32.f32 %v386
        %v427 = vcvt.s32.f32 %v387
        %v428 = vcvt.s32.f32 %v388
        %v429 = vadd.f32 %v389, %v390
        %v430 = vadd.f32 %v429, %v391
        %v431 = vadd.f32 %v430, %v392
        %v432 = vadd.f32 %v431, %v393
        %v433 = vrot.slane %v432, 4
        %v434 = vadd.f32 %v432, %v433
        %v435 = vrot.slane %v434, 2
        %v436 = vadd.f32 %v434, %v435
        %v437 = vrot.slane %v436, 1
        %v438 = vadd.f32 %v436, %v437
        %v439 = vadd.f32 %v394, %v395
        %v440 = vadd.f32 %v439, %v396
        %v441 = vadd.f32 %v440, %v397
        %v442 = vadd.f32 %v441, %v398
        %v443 = vrot.slane %v442, 4
        %v444 = vadd.f32 %v442, %v443
        %v445 = vrot.slane %v444, 2
        %v446 = vadd.f32 %v444, %v445
        %v447 = vrot.slane %v446, 1
        %v448 = vadd.f32 %v446, %v447
        %v449 = vadd.f32 %v399, %v400
        %v450 = vadd.f32 %v449, %v401
        %v451 = vadd.f32 %v450, %v402
        %v452 = vadd.f32 %v451, %v403
        %v453 = vrot.slane %v452, 4
        %v454 = vadd.f32 %v452, %v453
        %v455 = vrot.slane %v454, 2
        %v456 = vadd.f32 %v454, %v455
        %v457 = vrot.slane %v456, 1
        %v458 = vadd.f32 %v456, %v457
        %v459 = vadd.f32 %v404, %v405
        %v460 = vadd.f32 %v459, %v406
        %v461 = vadd.f32 %v460, %v407
        %v462 = vadd.f32 %v461, %v408
        %v463 = vrot.slane %v462, 4
        %v464 = vadd.f32 %v462, %v463
        %v465 = vrot.slane %v464, 2
        %v466 = vadd.f32 %v464, %v465
        %v467 = vrot.slane %v466, 1
        %v468 = vadd.f32 %v466, %v467
        %v469 = vadd.f32 %v409, %v410
        %v470 = vadd.f32 %v469, %v411
        %v471 = vadd.f32 %v470, %v412
        %v472 = vadd.f32 %v471, %v413
        %v473 = vrot.slane %v472, 4
        %v474 = vadd.f32 %v472, %v473
        %v475 = vrot.slane %v474, 2
        %v476 = vadd.f32 %v474, %v475
        %v477 = vrot.slane %v476, 1
        %v478 = vadd.f32 %v476, %v477
        %v479 = vadd.f32 %v414, %v415
        %v480 = vadd.f32 %v479, %v416
        %v481 = vadd.f32 %v480, %v417
        %v482 = vadd.f32 %v481, %v418
        %v483 = vrot.slane %v482, 4
        %v484 = vadd.f32 %v482, %v483
        %v485 = vrot.slane %v484, 2
        %v486 = vadd.f32 %v484, %v485
        %v487 = vrot.slane %v486, 1
        %v488 = vadd.f32 %v486, %v487
        %v489 = vadd.f32 %v419, %v420
        %v490 = vadd.f32 %v489, %v421
        %v491 = vadd.f32 %v490, %v422
        %v492 = vadd.f32 %v491, %v423
        %v493 = vrot.slane %v492, 4
        %v494 = vadd.f32 %v492, %v493
        %v495 = vrot.slane %v494, 2
        %v496 = vadd.f32 %v494, %v495
        %v497 = vrot.slane %v496, 1
        %v498 = vadd.f32 %v496, %v497
        %v499 = vadd.f32 %v424, %v425
        %v500 = vadd.f32 %v499, %v426
        %v501 = vadd.f32 %v500, %v427
        %v502 = vadd.f32 %v501, %v428
        %v503 = vrot.slane %v502, 4
        %v504 = vadd.f32 %v502, %v503
        %v505 = vrot.slane %v504, 2
        %v506 = vadd.f32 %v504, %v505
        %v507 = vrot.slane %v506, 1
        %v508 = vadd.f32 %v506, %v507
        %v509 = vld [vmem:[%s1] sm:$0xff]
        %v510 = vld [vmem:[%s1 + $0x8] sm:$0xff]
        %v511 = vld [vmem:[%s1 + $0x10] sm:$0xff]
        %v512 = vld [vmem:[%s1 + $0x18] sm:$0xff]
        %v513 = vld [vmem:[%s1 + $0x20] sm:$0xff]
        %v514 = vld [vmem:[%s1 + $0x28] sm:$0xff]
        %v515 = vld [vmem:[%s1 + $0x30] sm:$0xff]
        %v516 = vld [vmem:[%s1 + $0x38] sm:$0xff]
        %v517 = vld [vmem:[%s1 + $0x40] sm:$0xff]
        %v518 = vld [vmem:[%s1 + $0x48] sm:$0xff]
        %v519 = vld [vmem:[%s1 + $0x50] sm:$0xff]
        %v520 = vld [vmem:[%s1 + $0x58] sm:$0xff]
        %v521 = vld [vmem:[%s1 + $0x60] sm:$0xff]
        %v522 = vld [vmem:[%s1 + $0x68] sm:$0xff]
        %v523 = vld [vmem:[%s1 + $0x70] sm:$0xff]
        %v524 = vld [vmem:[%s1 + $0x78] sm:$0xff]
        %v525 = vld [vmem:[%s1 + $0x80] sm:$0xff]
        %v526 = vld [vmem:[%s1 + $0x88] sm:$0xff]
        %v527 = vld [vmem:[%s1 + $0x90] sm:$0xff]
        %v528 = vld [vmem:[%s1 + $0x98] sm:$0xff]
        %v529 = vld [vmem:[%s1 + $0xa0] sm:$0xff]
        %v530 = vld [vmem:[%s1 + $0xa8] sm:$0xff]
        %v531 = vld [vmem:[%s1 + $0xb0] sm:$0xff]
        %v532 = vld [vmem:[%s1 + $0xb8] sm:$0xff]
        %v533 = vld [vmem:[%s1 + $0xc0] sm:$0xff]
        %v534 = vld [vmem:[%s1 + $0xc8] sm:$0xff]
        %v535 = vld [vmem:[%s1 + $0xd0] sm:$0xff]
        %v536 = vld [vmem:[%s1 + $0xd8] sm:$0xff]
        %v537 = vld [vmem:[%s1 + $0xe0] sm:$0xff]
        %v538 = vld [vmem:[%s1 + $0xe8] sm:$0xff]
        %v539 = vld [vmem:[%s1 + $0xf0] sm:$0xff]
        %v540 = vld [vmem:[%s1 + $0xf8] sm:$0xff]
        %vm549 = vcmask 1041409
        %v550 = vsel %vm549, %v448, %v438
        %vm551 = vcmask 1042434
        %v552 = vsel %vm551, %v458, %v550
        %vm553 = vcmask 1043459
        %v554 = vsel %vm553, %v468, %v552
        %vm555 = vcmask 1044484
        %v556 = vsel %vm555, %v478, %v554
        %vm557 = vcmask 1045509
        %v558 = vsel %vm557, %v488, %v556
        %vm559 = vcmask 1046534
        %v560 = vsel %vm559, %v498, %v558
        %vm561 = vcmask 1047559
        %v562 = vsel %vm561, %v508, %v560
        %564 = vmatprep.subr.mxu0 0.0
        %565 = vmatpush1.msra.mxu0 %v524
        %566 = vmatprep.subr.mxu0 0.0
        %567 = vmatpush1.msra.mxu0 %v523
        %568 = vmatprep.subr.mxu0 0.0
        %569 = vmatpush1.msra.mxu0 %v522
        %570 = vmatprep.subr.mxu0 0.0
        %571 = vmatpush1.msra.mxu0 %v521
        %572 = vmatprep.subr.mxu0 0.0
        %573 = vmatpush1.msra.mxu0 %v520
        %574 = vmatprep.subr.mxu0 0.0
        %575 = vmatpush1.msra.mxu0 %v519
        %576 = vmatprep.subr.mxu0 0.0
        %577 = vmatpush1.msra.mxu0 %v518
        %578 = vmatprep.subr.mxu0 0.0
        %579 = vmatpush1.msra.mxu0 %v517
        %580 = vmatprep.subr.mxu0 0.0
        %581 = vmatpush1.msra.mxu0 %v516
        %582 = vmatprep.subr.mxu0 0.0
        %583 = vmatpush1.msra.mxu0 %v515
        %584 = vmatprep.subr.mxu0 0.0
        %585 = vmatpush1.msra.mxu0 %v514
        %586 = vmatprep.subr.mxu0 0.0
        %587 = vmatpush1.msra.mxu0 %v513
        %588 = vmatprep.subr.mxu0 0.0
        %589 = vmatpush1.msra.mxu0 %v512
        %590 = vmatprep.subr.mxu0 0.0
        %591 = vmatpush1.msra.mxu0 %v511
        %592 = vmatprep.subr.mxu0 0.0
        %593 = vmatpush1.msra.mxu0 %v510
        %594 = vmatprep.subr.mxu0 0.0
        %595 = vmatpush1.msra.mxu0 %v509
        %596 = vmatprep.subr.mxu0 0.0
        %597 = vmatpush2.msra.mxu0 0.0
        %598 = vmatprep.subr.mxu0 0.0
        %599 = vmatpush2.msra.mxu0 0.0
        %600 = vmatprep.subr.mxu0 0.0
        %601 = vmatpush2.msra.mxu0 0.0
        %602 = vmatprep.subr.mxu0 0.0
        %603 = vmatpush2.msra.mxu0 0.0
        %604 = vmatprep.subr.mxu0 0.0
        %605 = vmatpush2.msra.mxu0 0.0
        %606 = vmatprep.subr.mxu0 0.0
        %607 = vmatpush2.msra.mxu0 0.0
        %608 = vmatprep.subr.mxu0 0.0
        %609 = vmatpush2.msra.mxu0 0.0
        %610 = vmatprep.subr.mxu0 0.0
        %611 = vmatpush2.msra.mxu0 0.0
        %612 = vmatprep.subr.mxu0 0.0
        %613 = vmatpush2.msra.mxu0 0.0
        %614 = vmatprep.subr.mxu0 0.0
        %615 = vmatpush2.msra.mxu0 0.0
        %616 = vmatprep.subr.mxu0 0.0
        %617 = vmatpush2.msra.mxu0 0.0
        %618 = vmatprep.subr.mxu0 0.0
        %619 = vmatpush2.msra.mxu0 0.0
        %620 = vmatprep.subr.mxu0 0.0
        %621 = vmatpush2.msra.mxu0 0.0
        %622 = vmatprep.subr.mxu0 0.0
        %623 = vmatpush2.msra.mxu0 0.0
        %624 = vmatprep.subr.mxu0 0.0
        %625 = vmatpush2.msra.mxu0 0.0
        %626 = vmatprep.subr.mxu0 0.0
        %627 = vmatpush2.msra.mxu0 0.0
        %628 = vmatprep.mubr.f32.mxu0 0.0
        %629 = vmatmul.mubr.f32.gmra.mxu0 %v562
        %v630 = vpop.f32.mrf.mxu0
        %v631 = vadd.f32 0.0, %v630
        %v632 = vpop.f32.mrf.mxu0
        %633 = vdwg.mxu0
        %v634 = vxor.u32 %v631, 2147483648
        %v635 = vmul.f32 %v634, 1.442695
        %v636 = vpow.pop %v635
        %v637 = vadd.f32 %v636, 1.0
        %v638 = vrcp.pop %v637
        %v639 = vmul.f32 1.0, %v638
        %640 = vmatprep.subr.mxu0 0.0
        %641 = vmatpush1.msra.mxu0 %v540
        %642 = vmatprep.subr.mxu0 0.0
        %643 = vmatpush1.msra.mxu0 %v539
        %644 = vmatprep.subr.mxu0 0.0
        %645 = vmatpush1.msra.mxu0 %v538
        %646 = vmatprep.subr.mxu0 0.0
        %647 = vmatpush1.msra.mxu0 %v537
        %648 = vmatprep.subr.mxu0 0.0
        %649 = vmatpush1.msra.mxu0 %v536
        %650 = vmatprep.subr.mxu0 0.0
        %651 = vmatpush1.msra.mxu0 %v535
        %652 = vmatprep.subr.mxu0 0.0
        %653 = vmatpush1.msra.mxu0 %v534
        %654 = vmatprep.subr.mxu0 0.0
        %655 = vmatpush1.msra.mxu0 %v533
        %656 = vmatprep.subr.mxu0 0.0
        %657 = vmatpush1.msra.mxu0 %v532
        %658 = vmatprep.subr.mxu0 0.0
        %659 = vmatpush1.msra.mxu0 %v531
        %660 = vmatprep.subr.mxu0 0.0
        %661 = vmatpush1.msra.mxu0 %v530
        %662 = vmatprep.subr.mxu0 0.0
        %663 = vmatpush1.msra.mxu0 %v529
        %664 = vmatprep.subr.mxu0 0.0
        %665 = vmatpush1.msra.mxu0 %v528
        %666 = vmatprep.subr.mxu0 0.0
        %667 = vmatpush1.msra.mxu0 %v527
        %668 = vmatprep.subr.mxu0 0.0
        %669 = vmatpush1.msra.mxu0 %v526
        %670 = vmatprep.subr.mxu0 0.0
        %671 = vmatpush1.msra.mxu0 %v525
        %672 = vmatprep.subr.mxu0 0.0
        %673 = vmatpush2.msra.mxu0 0.0
        %674 = vmatprep.subr.mxu0 0.0
        %675 = vmatpush2.msra.mxu0 0.0
        %676 = vmatprep.subr.mxu0 0.0
        %677 = vmatpush2.msra.mxu0 0.0
        %678 = vmatprep.subr.mxu0 0.0
        %679 = vmatpush2.msra.mxu0 0.0
        %680 = vmatprep.subr.mxu0 0.0
        %681 = vmatpush2.msra.mxu0 0.0
        %682 = vmatprep.subr.mxu0 0.0
        %683 = vmatpush2.msra.mxu0 0.0
        %684 = vmatprep.subr.mxu0 0.0
        %685 = vmatpush2.msra.mxu0 0.0
        %686 = vmatprep.subr.mxu0 0.0
        %687 = vmatpush2.msra.mxu0 0.0
        %688 = vmatprep.subr.mxu0 0.0
        %689 = vmatpush2.msra.mxu0 0.0
        %690 = vmatprep.subr.mxu0 0.0
        %691 = vmatpush2.msra.mxu0 0.0
        %692 = vmatprep.subr.mxu0 0.0
        %693 = vmatpush2.msra.mxu0 0.0
        %694 = vmatprep.subr.mxu0 0.0
        %695 = vmatpush2.msra.mxu0 0.0
        %696 = vmatprep.subr.mxu0 0.0
        %697 = vmatpush2.msra.mxu0 0.0
        %698 = vmatprep.subr.mxu0 0.0
        %699 = vmatpush2.msra.mxu0 0.0
        %700 = vmatprep.subr.mxu0 0.0
        %701 = vmatpush2.msra.mxu0 0.0
        %702 = vmatprep.subr.mxu0 0.0
        %703 = vmatpush2.msra.mxu0 0.0
        %704 = vmatprep.mubr.f32.mxu0 0.0
        %705 = vmatmul.mubr.f32.gmra.mxu0 %v639
        %v706 = vpop.f32.mrf.mxu0
        %v707 = vadd.f32 0.0, %v706
        %v708 = vpop.f32.mrf.mxu0
        %709 = vdwg.mxu0
        %v710 = vmul.f32 %v639, %v707
        %711 = vadd.xlane.f32.xlu0 %v710
        %v712 = vpop.xlane.xlu0 %711
        %vm713 = vcmp.eq.s32.totalorder %v148, 127
        %v714 = vsel %vm713, %v712, %v631
        %715 = vst [vmem:[%s139] sm:$0xff] %v714
        %s716 = sand.u32 %s71, 1
        %s717 = scalar_lea.sflag [#allocation3], %s716
        %s718 = sand.u32 %s71, 1
        %s719 = smul.addr %s718, 8
        %s720 = scalar_lea.vmem [#allocation2], %s719
        // Predicated region
        $region29: #{tpu_custom_call.1} parent=27 // pred_check
          %p721 = pneg %p81
        $region30: #{tpu_custom_call.1} parent=27 // pred_check_branch
          %723 = sbr.rel (%p721) target = $region32
        $region31: #{tpu_custom_call.1} parent=27 // pred_region
          %s725 = ssub.s32 128, 128
          %726 = vsyncadd %s717, %s725
          %s727 = smul.addr %s16, 128
          %s728 = scalar_lea.hbm %s2, %s727
          %s730 = sshll.u32 %s720, 4
          %s731 = int_to_ptr.vmem [resolvable:$true] %s730
          %733 = dma.vmem_to_hbm [thread:$0]  %s731, 128, %s728, %s717
        $region32: #{tpu_custom_call.1} parent=27 // pred_fallthru
          _
      $region28: #{tpu_custom_call.1} parent=5 // pred_fallthru
        _
      %p734 = scmp.le.s32.totalorder 2, %s11
      // Predicated region
      $region33: #{tpu_custom_call.1} parent=5 // pred_check
        %p735 = pneg %p734
      $region34: #{tpu_custom_call.1} parent=5 // pred_check_branch
        %737 = sbr.rel (%p735) target = $region36
      $region35: #{tpu_custom_call.1} parent=5 // pred_region
        %s738 = ssub.s32 %s11, 2
        // Predicated region
        $region37: #{tpu_custom_call.1} parent=35 // pred_check
          %p739 = pneg %p87
        $region38: #{tpu_custom_call.1} parent=35 // pred_check_branch
          %741 = sbr.rel (%p739) target = $region40
        $region39: #{tpu_custom_call.1} parent=35 // pred_region
          %s742 = sand.u32 %s72, 1
          %s743 = scalar_lea.sflag [#allocation3], %s742
          %s744 = sand.u32 %s72, 1
          %s745 = smul.addr %s744, 8
          %s746 = scalar_lea.vmem [#allocation2], %s745
          %747 = dma.done %s743, 128
        $region40: #{tpu_custom_call.1} parent=35 // pred_fallthru
          _
      $region36: #{tpu_custom_call.1} parent=5 // pred_fallthru
        _
    $region6: #{tpu_custom_call.1} parent=1 // loop_footer
      %s15 = sadd.s32 1, %s11
    $region7: #{tpu_custom_call.1} parent=1 // loop_footer_branch
      %10 = sbr.rel target = $region3
    $region8: #{tpu_custom_call.1} parent=1 // loop_exit
      _
    %748 = vsyncpa [#allocation3], 1
    %s749 = scalar_lea.sflag [#allocation3], 1
    %750 = vsyncpa %s749, 1

</llo_original>
